<compile_context>
chip_gen: v6e
topology: v6e:2x2x1
jax: 0.10.0
libtpu: 0.0.40
codegen_flags: <defaults>
</compile_context>

<pallas_src>
import functools

import jax
import jax.numpy as jnp
from jax.experimental import pallas as pl
from jax.experimental.pallas import tpu as pltpu


# ----------------------------------------------------------------------------
# Fused encoder kernel: whole forward pass in one kernel invocation.
# refs = (xc, [W_i, b_i]* (hidden layers incl. layer 0), W_head, b_head, out)
# ----------------------------------------------------------------------------
def _encoder_fused_kernel(*refs):
    xc_ref = refs[0]
    wh_ref, bh_ref, out_ref = refs[-3], refs[-2], refs[-1]
    layer_refs = refs[1:-3]

    # Activations live entirely in vregs/VMEM; cast to bf16 only at MXU boundaries.
    h = xc_ref[...].astype(jnp.bfloat16)

    for li in range(len(layer_refs) // 2):
        w_ref, b_ref = layer_refs[2 * li], layer_refs[2 * li + 1]
        acc = jnp.dot(h, w_ref[...], preferred_element_type=jnp.float32)
        acc = acc + b_ref[...]            # f32 bias add (BN folded into W/b)
        acc = jnp.maximum(acc, 0.0)       # f32 ReLU (cheap VPU filler under MXU)
        h = acc.astype(jnp.bfloat16)

    # Fused mu|logvar head -> one lane-dense [TB, 128*k] output tile.
    out = jnp.dot(h, wh_ref[...], preferred_element_type=jnp.float32) + bh_ref[...]
    out_ref[...] = out.astype(out_ref.dtype)


def encoder_forward(params, x, condition, *, latent_dim):
    B = x.shape[0]
    # Concat once in the wrapper; kernel then does a single dense first-layer matmul.
    xc = jnp.concatenate([x, condition], axis=1).astype(jnp.float32)
    Dk = xc.shape[1]
    head_out = params["w_head"].shape[1]

    # Batch tiling: weights map to block (0,0) for every grid step (VMEM-resident,
    # single-buffered); activations/output tiled along batch so the pipeline can
    # double-buffer and megacore (v7x) can shard the batch axis. TB up to 256 fills
    # the 2x256^2 MXU M-dim on v6e/v7x; for tiny B this degenerates to grid=(1,).
    TB = B if B <= 256 else 256
    grid = (pl.cdiv(B, TB),)

    weight_args = []
    for (w, b) in params["layers"]:
        weight_args.extend([w, b])
    weight_args.extend([params["w_head"], params["b_head"]])

    # Grid-invariant operands: single-buffered (no useless double-buffer VMEM).
    def _weight_spec(a):
        return pl.BlockSpec(a.shape, lambda i: (0, 0),
                            pipeline_mode=pl.Buffered(1))

    in_specs = [pl.BlockSpec((TB, Dk), lambda i: (i, 0))] + \
               [_weight_spec(a) for a in weight_args]

    # --- cost estimate (helps XLA schedule the custom call) ---------------------
    flops = 0
    for a in weight_args:
        if a.ndim == 2 and a.shape[0] > 1:          # weight matrices only
            flops += 2 * B * a.shape[0] * a.shape[1]
    weight_bytes = sum(int(a.size) * a.dtype.itemsize for a in weight_args)
    io_bytes = int(xc.size) * 4 + B * head_out * 4
    cost = pl.CostEstimate(flops=flops, transcendentals=0,
                           bytes_accessed=weight_bytes + io_bytes)

    # --- explicit VMEM budget (v7x only has 64 MiB physical / 32 MiB scoped) ----
    act_cols = max(a.shape[1] for a in weight_args)
    tile_bytes = TB * Dk * 4 * 2 + TB * head_out * 4 * 2 + TB * act_cols * 4 * 3
    vmem_limit = int(min(max(2 * (weight_bytes + tile_bytes), 16 << 20), 48 << 20))

    out = pl.pallas_call(
        _encoder_fused_kernel,
        out_shape=jax.ShapeDtypeStruct((B, head_out), jnp.float32),
        grid=grid,
        in_specs=in_specs,
        out_specs=pl.BlockSpec((TB, head_out), lambda i: (i, 0)),
        cost_estimate=cost,
        compiler_params=pltpu.CompilerParams(
            dimension_semantics=("parallel",),
            vmem_limit_bytes=vmem_limit),
    )(xc, *weight_args)

    mu = out[:, :latent_dim]
    logvar = out[:, latent_dim:2 * latent_dim]
    return mu, logvar


# ----------------------------------------------------------------------------
# Parameter construction: PyTorch-like init, eval-mode BN folded into W/b,
# feature dims zero-padded to 128 lanes, weights cast to bf16.
# ----------------------------------------------------------------------------
def _round_up(n, m):
    return ((n + m - 1) // m) * m


def _init_linear(key, in_dim, out_dim):
    kw, kb = jax.random.split(key)
    bound = 1.0 / jnp.sqrt(jnp.float32(in_dim))
    w = jax.random.uniform(kw, (in_dim, out_dim), jnp.float32, -bound, bound)
    b = jax.random.uniform(kb, (out_dim,), jnp.float32, -bound, bound)
    return w, b


def _fold_bn(w, b, out_dim, eps=1e-5):
    # BatchNorm1d defaults: gamma=1, beta=0, running_mean=0, running_var=1.
    gamma = jnp.ones((out_dim,), jnp.float32)
    beta = jnp.zeros((out_dim,), jnp.float32)
    running_mean = jnp.zeros((out_dim,), jnp.float32)
    running_var = jnp.ones((out_dim,), jnp.float32)
    scale = gamma / jnp.sqrt(running_var + eps)
    shift = beta - running_mean * scale
    return w * scale[None, :], b * scale + shift


def _pad2(a, rows, cols):
    return jnp.pad(a, ((0, rows - a.shape[0]), (0, cols - a.shape[1])))


def init_encoder_params(key, input_dim, condition_dim, latent_dim, hidden_dims,
                        lane=128):
    layers = []
    prev, prev_p = input_dim + condition_dim, input_dim + condition_dim
    for h in hidden_dims:
        key, sub = jax.random.split(key)
        w, b = _init_linear(sub, prev, h)
        w, b = _fold_bn(w, b, h)
        hp = _round_up(h, lane)            # pad to exactly 128-lane multiple, no more
        layers.append((_pad2(w, prev_p, hp).astype(jnp.bfloat16),
                       jnp.pad(b, (0, hp - h))[None, :]))          # f32 [1, hp]
        prev, prev_p = h, hp

    # Fused mu|logvar head: columns [0:L] = mu, [L:2L] = logvar, rest zero-pad.
    key, k_mu, k_lv = jax.random.split(key, 3)
    w_mu, b_mu = _init_linear(k_mu, prev, latent_dim)
    w_lv, b_lv = _init_linear(k_lv, prev, latent_dim)
    w_head = jnp.concatenate([w_mu, w_lv], axis=1)
    b_head = jnp.concatenate([b_mu, b_lv], axis=0)
    head_out = _round_up(2 * latent_dim, lane)
    w_head = _pad2(w_head, prev_p, head_out).astype(jnp.bfloat16)
    b_head = jnp.pad(b_head, (0, head_out - 2 * latent_dim))[None, :]

    return {"layers": layers, "w_head": w_head, "b_head": b_head}


# ----------------------------------------------------------------------------
# Pure-jnp reference (same quantized weights) for an in-script sanity check.
# ----------------------------------------------------------------------------
def _reference_forward(params, x, condition, *, latent_dim):
    h = jnp.concatenate([x, condition], axis=1).astype(jnp.float32)
    for (w, b) in params["layers"]:
        h = jnp.maximum(h @ w.astype(jnp.float32) + b, 0.0)
    out = h @ params["w_head"].astype(jnp.float32) + params["b_head"]
    return out[:, :latent_dim], out[:, latent_dim:2 * latent_dim]


if __name__ == "__main__":
    # Small shapes consistent with the module's [batch, input_dim] /
    # [batch, condition_dim] inputs.
    batch = 8
    input_dim = 32
    condition_dim = 16
    latent_dim = 8
    hidden_dims = [64, 32]

    key = jax.random.PRNGKey(0)
    k_params, k_x, k_c = jax.random.split(key, 3)

    params = init_encoder_params(k_params, input_dim, condition_dim,
                                 latent_dim, hidden_dims)

    x = jax.random.normal(k_x, (batch, input_dim), jnp.float32)
    cond_idx = jax.random.randint(k_c, (batch,), 0, condition_dim)
    condition = jax.nn.one_hot(cond_idx, condition_dim, dtype=jnp.float32)

    fwd = jax.jit(functools.partial(encoder_forward, latent_dim=latent_dim))
    mu, logvar = fwd(params, x, condition)
    jax.block_until_ready((mu, logvar))

    mu_ref, lv_ref = _reference_forward(params, x, condition,
                                        latent_dim=latent_dim)

    assert mu.shape == (batch, latent_dim)
    assert logvar.shape == (batch, latent_dim)
    assert bool(jnp.all(jnp.isfinite(mu))) and bool(jnp.all(jnp.isfinite(logvar)))
    # bf16 activation casts inside the kernel -> loose tolerance vs f32 reference.
    assert float(jnp.max(jnp.abs(mu - mu_ref))) < 0.1
    assert float(jnp.max(jnp.abs(logvar - lv_ref))) < 0.1
    print("KERNEL_OK")
</pallas_src>

<mosaic_0001>
module attributes {stable_mosaic.version = 11 : i64} {
  func.func @_encoder_fused_kernel(%arg0: i32, %arg1: memref<8x48xf32, #tpu.memory_space<vmem>>, %arg2: memref<48x128xbf16, #tpu.memory_space<vmem>>, %arg3: memref<1x128xf32, #tpu.memory_space<vmem>>, %arg4: memref<128x128xbf16, #tpu.memory_space<vmem>>, %arg5: memref<1x128xf32, #tpu.memory_space<vmem>>, %arg6: memref<128x128xbf16, #tpu.memory_space<vmem>>, %arg7: memref<1x128xf32, #tpu.memory_space<vmem>>, %arg8: memref<8x128xf32, #tpu.memory_space<vmem>>) attributes {dimension_semantics = [#tpu.dimension_semantics<parallel>], iteration_bounds = array<i64: 1>, scalar_prefetch = 0 : i64, scratch_operands = 0 : i64, tpu.core_type = #tpu.core_type<tc>, window_params = [{transform_indices = @transform_0, window_bounds = array<i64: 8, 48>}, {pipeline_mode = #tpu.pipeline_mode<synchronous>, transform_indices = @transform_1, window_bounds = array<i64: 48, 128>}, {pipeline_mode = #tpu.pipeline_mode<synchronous>, transform_indices = @transform_2, window_bounds = array<i64: 1, 128>}, {pipeline_mode = #tpu.pipeline_mode<synchronous>, transform_indices = @transform_3, window_bounds = array<i64: 128, 128>}, {pipeline_mode = #tpu.pipeline_mode<synchronous>, transform_indices = @transform_4, window_bounds = array<i64: 1, 128>}, {pipeline_mode = #tpu.pipeline_mode<synchronous>, transform_indices = @transform_5, window_bounds = array<i64: 128, 128>}, {pipeline_mode = #tpu.pipeline_mode<synchronous>, transform_indices = @transform_6, window_bounds = array<i64: 1, 128>}, {transform_indices = @transform_7, window_bounds = array<i64: 8, 128>}]} {
    %c0 = arith.constant 0 : index
    %c0_0 = arith.constant 0 : index
    %0 = vector.load %arg1[%c0, %c0_0] : memref<8x48xf32, #tpu.memory_space<vmem>>, vector<8x48xf32>
    %1 = arith.truncf %0 : vector<8x48xf32> to vector<8x48xbf16>
    %c0_1 = arith.constant 0 : index
    %c0_2 = arith.constant 0 : index
    %2 = vector.load %arg2[%c0_1, %c0_2] : memref<48x128xbf16, #tpu.memory_space<vmem>>, vector<48x128xbf16>
    %cst = arith.constant dense<0.000000e+00> : vector<8x128xf32>
    %3 = tpu.matmul %1, %2, %cst {dimension_numbers = #tpu.dot_dimension_numbers<[1], [0], [0], [1], [0, 0, 1, 1], [], []>} : vector<8x48xbf16>, vector<48x128xbf16>, vector<8x128xf32> -> vector<8x128xf32>
    %c0_3 = arith.constant 0 : index
    %c0_4 = arith.constant 0 : index
    %4 = vector.load %arg3[%c0_3, %c0_4] : memref<1x128xf32, #tpu.memory_space<vmem>>, vector<1x128xf32>
    %5 = vector.broadcast %4 : vector<1x128xf32> to vector<8x128xf32>
    %6 = arith.addf %3, %5 : vector<8x128xf32>
    %cst_5 = arith.constant 0.000000e+00 : f32
    %7 = vector.broadcast %cst_5 : f32 to vector<8x128xf32>
    %8 = arith.maximumf %6, %7 : vector<8x128xf32>
    %9 = arith.truncf %8 : vector<8x128xf32> to vector<8x128xbf16>
    %c0_6 = arith.constant 0 : index
    %c0_7 = arith.constant 0 : index
    %10 = vector.load %arg4[%c0_6, %c0_7] : memref<128x128xbf16, #tpu.memory_space<vmem>>, vector<128x128xbf16>
    %cst_8 = arith.constant dense<0.000000e+00> : vector<8x128xf32>
    %11 = tpu.matmul %9, %10, %cst_8 {dimension_numbers = #tpu.dot_dimension_numbers<[1], [0], [0], [1], [0, 0, 1, 1], [], []>} : vector<8x128xbf16>, vector<128x128xbf16>, vector<8x128xf32> -> vector<8x128xf32>
    %c0_9 = arith.constant 0 : index
    %c0_10 = arith.constant 0 : index
    %12 = vector.load %arg5[%c0_9, %c0_10] : memref<1x128xf32, #tpu.memory_space<vmem>>, vector<1x128xf32>
    %13 = vector.broadcast %12 : vector<1x128xf32> to vector<8x128xf32>
    %14 = arith.addf %11, %13 : vector<8x128xf32>
    %cst_11 = arith.constant 0.000000e+00 : f32
    %15 = vector.broadcast %cst_11 : f32 to vector<8x128xf32>
    %16 = arith.maximumf %14, %15 : vector<8x128xf32>
    %17 = arith.truncf %16 : vector<8x128xf32> to vector<8x128xbf16>
    %c0_12 = arith.constant 0 : index
    %c0_13 = arith.constant 0 : index
    %18 = vector.load %arg6[%c0_12, %c0_13] : memref<128x128xbf16, #tpu.memory_space<vmem>>, vector<128x128xbf16>
    %cst_14 = arith.constant dense<0.000000e+00> : vector<8x128xf32>
    %19 = tpu.matmul %17, %18, %cst_14 {dimension_numbers = #tpu.dot_dimension_numbers<[1], [0], [0], [1], [0, 0, 1, 1], [], []>} : vector<8x128xbf16>, vector<128x128xbf16>, vector<8x128xf32> -> vector<8x128xf32>
    %c0_15 = arith.constant 0 : index
    %c0_16 = arith.constant 0 : index
    %20 = vector.load %arg7[%c0_15, %c0_16] : memref<1x128xf32, #tpu.memory_space<vmem>>, vector<1x128xf32>
    %21 = vector.broadcast %20 : vector<1x128xf32> to vector<8x128xf32>
    %22 = arith.addf %19, %21 : vector<8x128xf32>
    %c0_17 = arith.constant 0 : index
    %c0_18 = arith.constant 0 : index
    %23 = vector.load %arg8[%c0_17, %c0_18] : memref<8x128xf32, #tpu.memory_space<vmem>>, vector<8x128xf32>
    tpu.vector_store %arg8[%c0_17, %c0_18], %22 {strides = array<i32>} : memref<8x128xf32, #tpu.memory_space<vmem>>, vector<8x128xf32>,
    return
  }
  func.func @transform_0(%arg0: i32) -> (i32, i32) {
    %c0_i32 = arith.constant 0 : i32
    %c0_i32_0 = arith.constant 0 : i32
    return %arg0, %c0_i32 : i32, i32
  }
  func.func @transform_1(%arg0: i32) -> (i32, i32) {
    %c0_i32 = arith.constant 0 : i32
    %c0_i32_0 = arith.constant 0 : i32
    %c0_i32_1 = arith.constant 0 : i32
    return %c0_i32, %c0_i32_0 : i32, i32
  }
  func.func @transform_2(%arg0: i32) -> (i32, i32) {
    %c0_i32 = arith.constant 0 : i32
    %c0_i32_0 = arith.constant 0 : i32
    %c0_i32_1 = arith.constant 0 : i32
    return %c0_i32, %c0_i32_0 : i32, i32
  }
  func.func @transform_3(%arg0: i32) -> (i32, i32) {
    %c0_i32 = arith.constant 0 : i32
    %c0_i32_0 = arith.constant 0 : i32
    %c0_i32_1 = arith.constant 0 : i32
    return %c0_i32, %c0_i32_0 : i32, i32
  }
  func.func @transform_4(%arg0: i32) -> (i32, i32) {
    %c0_i32 = arith.constant 0 : i32
    %c0_i32_0 = arith.constant 0 : i32
    %c0_i32_1 = arith.constant 0 : i32
    return %c0_i32, %c0_i32_0 : i32, i32
  }
  func.func @transform_5(%arg0: i32) -> (i32, i32) {
    %c0_i32 = arith.constant 0 : i32
    %c0_i32_0 = arith.constant 0 : i32
    %c0_i32_1 = arith.constant 0 : i32
    return %c0_i32, %c0_i32_0 : i32, i32
  }
  func.func @transform_6(%arg0: i32) -> (i32, i32) {
    %c0_i32 = arith.constant 0 : i32
    %c0_i32_0 = arith.constant 0 : i32
    %c0_i32_1 = arith.constant 0 : i32
    return %c0_i32, %c0_i32_0 : i32, i32
  }
  func.func @transform_7(%arg0: i32) -> (i32, i32) {
    %c0_i32 = arith.constant 0 : i32
    %c0_i32_0 = arith.constant 0 : i32
    return %arg0, %c0_i32 : i32, i32
  }
}

</mosaic_0001>

<llo_original>
// kernel: encoder_forward.1
$region0: #{encoder_forward.1}
  #allocation0 [shape = 'u32[]', space=smem, size = 0x4, offset = 0x4, fixed_abs, tag = 'smem constant byte address 0x4 - core index']
  #allocation1 [shape = 'u32[144,128]{1,0:T(1,128)}', space=vmem, size = 0x12000, scoped, tag = 'internal scratch']
  %s0 = inlined_call_operand.vmem [shape: f32[8,48], index: 0, kind: input, shape index: {}]
  %s1 = inlined_call_operand.vmem [shape: bf16[48,128], index: 1, kind: input, shape index: {}]
  %s2 = inlined_call_operand.vmem [shape: f32[1,128], index: 2, kind: input, shape index: {}]
  %s3 = inlined_call_operand.hbm [shape: bf16[128,128], index: 3, kind: input, shape index: {}]
  %s4 = inlined_call_operand.vmem [shape: f32[1,128], index: 4, kind: input, shape index: {}]
  %s5 = inlined_call_operand.hbm [shape: bf16[128,128], index: 5, kind: input, shape index: {}]
  %s6 = inlined_call_operand.hbm [shape: f32[1,128], index: 6, kind: input, shape index: {}]
  %s7 = inlined_call_operand.vmem [shape: f32[8,128], index: 7, kind: output, shape index: {}]
  %s8 = sld [smem:[#allocation0]]
  $region50: #{encoder_forward.1} parent=0
    _
  %s10 = ssub.s32 1, %s8
  %s11 = scalar_select 0, %s10, %s8
  $region1: #{encoder_forward.1} parent=0
    #allocation2 [shape = 'u8[32768]{0}', space=vmem, size = 0x8000, scoped, tag = 'input window, operand 3, single buffered']
    #allocation3 [shape = 's32[1]{0}', space=sflag, size = 0x4, scoped, tag = 'scoped memory for encoder_forward.1']
    #allocation4 [shape = 'u8[32768]{0}', space=vmem, size = 0x8000, scoped, tag = 'input window, operand 5, single buffered']
    #allocation5 [shape = 's32[1]{0}', space=sflag, size = 0x4, scoped, tag = 'scoped memory for encoder_forward.1']
    #allocation6 [shape = 'u8[512]{0}', space=vmem, size = 0x400, scoped, tag = 'input window, operand 6, single buffered']
    %12 = vsyncpa [#allocation3], 0
    %13 = vsyncpa [#allocation5], 0
    // Predicated region
    $region2: #{encoder_forward.1} parent=1 // pred_check
      _
    $region3: #{encoder_forward.1} parent=1 // pred_check_branch
      %15 = sbr.rel (0) target = $region5
    $region4: #{encoder_forward.1} parent=1 // pred_region
      _
    $region5: #{encoder_forward.1} parent=1 // pred_fallthru
      _
    // Predicated region
    $region6: #{encoder_forward.1} parent=1 // pred_check
      _
    $region7: #{encoder_forward.1} parent=1 // pred_check_branch
      %17 = sbr.rel (0) target = $region9
    $region8: #{encoder_forward.1} parent=1 // pred_region
      _
    $region9: #{encoder_forward.1} parent=1 // pred_fallthru
      _
    // Predicated region
    $region10: #{encoder_forward.1} parent=1 // pred_check
      _
    $region11: #{encoder_forward.1} parent=1 // pred_check_branch
      %19 = sbr.rel (0) target = $region13
    $region12: #{encoder_forward.1} parent=1 // pred_region
      _
    $region13: #{encoder_forward.1} parent=1 // pred_fallthru
      _
    // Predicated region
    $region14: #{encoder_forward.1} parent=1 // pred_check
      _
    $region15: #{encoder_forward.1} parent=1 // pred_check_branch
      %21 = sbr.rel (0) target = $region17
    $region16: #{encoder_forward.1} parent=1 // pred_region
      %s23 = ssub.s32 1024, 1024
      %24 = vsyncadd [#allocation3], %s23
      %s25 = sshll.u32 [#allocation2], 4
      %s26 = int_to_ptr.vmem [resolvable:$true] %s25
      %31 = dma.hbm_to_vmem [thread:$0]  %s3, 1024, %s26, [#allocation3], 64, 64, 4
    $region17: #{encoder_forward.1} parent=1 // pred_fallthru
      _
    // Predicated region
    $region18: #{encoder_forward.1} parent=1 // pred_check
      _
    $region19: #{encoder_forward.1} parent=1 // pred_check_branch
      %33 = sbr.rel (0) target = $region21
    $region20: #{encoder_forward.1} parent=1 // pred_region
      _
    $region21: #{encoder_forward.1} parent=1 // pred_fallthru
      _
    // Predicated region
    $region22: #{encoder_forward.1} parent=1 // pred_check
      _
    $region23: #{encoder_forward.1} parent=1 // pred_check_branch
      %35 = sbr.rel (0) target = $region25
    $region24: #{encoder_forward.1} parent=1 // pred_region
      %s37 = ssub.s32 1024, 1024
      %38 = vsyncadd [#allocation5], %s37
      %s39 = sshll.u32 [#allocation4], 4
      %s40 = int_to_ptr.vmem [resolvable:$true] %s39
      %45 = dma.hbm_to_vmem [thread:$0]  %s5, 1024, %s40, [#allocation5], 64, 64, 4
    $region25: #{encoder_forward.1} parent=1 // pred_fallthru
      _
    // Predicated region
    $region26: #{encoder_forward.1} parent=1 // pred_check
      _
    $region27: #{encoder_forward.1} parent=1 // pred_check_branch
      %47 = sbr.rel (0) target = $region29
    $region28: #{encoder_forward.1} parent=1 // pred_region
      %s49 = ssub.s32 16, 16
      %50 = vsyncadd [#allocation5], %s49
      %s52 = sshll.u32 [#allocation6], 4
      %s53 = int_to_ptr.vmem [resolvable:$true] %s52
      %55 = dma.hbm_to_vmem [thread:$0]  %s6, 16, %s53, [#allocation5]
    $region29: #{encoder_forward.1} parent=1 // pred_fallthru
      _
    // Predicated region
    $region30: #{encoder_forward.1} parent=1 // pred_check
      _
    $region31: #{encoder_forward.1} parent=1 // pred_check_branch
      %57 = sbr.rel (0) target = $region33
    $region32: #{encoder_forward.1} parent=1 // pred_region
      %58 = dma.done [#allocation3], 1024
    $region33: #{encoder_forward.1} parent=1 // pred_fallthru
      _
    // Predicated region
    $region34: #{encoder_forward.1} parent=1 // pred_check
      _
    $region35: #{encoder_forward.1} parent=1 // pred_check_branch
      %60 = sbr.rel (0) target = $region37
    $region36: #{encoder_forward.1} parent=1 // pred_region
      %61 = dma.done [#allocation5], 1024
    $region37: #{encoder_forward.1} parent=1 // pred_fallthru
      _
    // Predicated region
    $region38: #{encoder_forward.1} parent=1 // pred_check
      _
    $region39: #{encoder_forward.1} parent=1 // pred_check_branch
      %63 = sbr.rel (0) target = $region41
    $region40: #{encoder_forward.1} parent=1 // pred_region
      %64 = dma.done [#allocation5], 16
    $region41: #{encoder_forward.1} parent=1 // pred_fallthru
      _
    %v66 = vld [vmem:[%s0] sm:$0xff]
    %v67 = vpack.c.bf16 %v66, %v66
    %v68 = vld [vmem:[%s1] sm:$0xf]
    %v69 = vld [vmem:[%s1 + $0x4] sm:$0xf]
    %v70 = vld [vmem:[%s1 + $0x8] sm:$0xf]
    %v71 = vld [vmem:[%s1 + $0xc] sm:$0xf]
    %v72 = vld [vmem:[%s1 + $0x10] sm:$0xf]
    %v73 = vld [vmem:[%s1 + $0x14] sm:$0xf]
    %v74 = vld [vmem:[%s2] sm:$0x1]
    %v76 = vlaneseq
    %v77 = vshrl.u32 %v76, 7
    %v78 = vsub.s32 0, %v77
    %v79 = vrot.slane %v74, %v78
    %v87 = vunpack.c.l.b16 %v68
    %v88 = vunpack.c.l.b16 %v69
    %v89 = vunpack.c.l.b16 %v70
    %v90 = vunpack.c.l.b16 %v71
    %v91 = vunpack.c.l.b16 %v72
    %v92 = vunpack.c.l.b16 %v73
    %v93 = vpack.c.b16 %v88, %v87
    %v94 = vpack.c.b16 %v90, %v89
    %v95 = vpack.c.b16 %v92, %v91
    %vm99 = vcmask 392192
    %v101 = vsel %vm99, %v67, 0
    %103 = vmatprep.subr.bf16.mxu0 0
    %104 = vmatpush1.bf16.msra.mxu0 0
    %105 = vmatprep.subr.bf16.mxu0 0
    %106 = vmatpush1.bf16.msra.mxu0 0
    %107 = vmatprep.subr.bf16.mxu0 0
    %108 = vmatpush1.bf16.msra.mxu0 0
    %109 = vmatprep.subr.bf16.mxu0 0
    %110 = vmatpush1.bf16.msra.mxu0 0
    %111 = vmatprep.subr.bf16.mxu0 0
    %112 = vmatpush1.bf16.msra.mxu0 0
    %113 = vmatprep.subr.bf16.mxu0 0
    %114 = vmatpush1.bf16.msra.mxu0 %v95
    %115 = vmatprep.subr.bf16.mxu0 0
    %116 = vmatpush1.bf16.msra.mxu0 %v94
    %117 = vmatprep.subr.bf16.mxu0 0
    %118 = vmatpush1.bf16.msra.mxu0 %v93
    %119 = vmatprep.subr.bf16.mxu0 0
    %120 = vmatpush2.bf16.msra.mxu0 0
    %121 = vmatprep.subr.bf16.mxu0 0
    %122 = vmatpush2.bf16.msra.mxu0 0
    %123 = vmatprep.subr.bf16.mxu0 0
    %124 = vmatpush2.bf16.msra.mxu0 0
    %125 = vmatprep.subr.bf16.mxu0 0
    %126 = vmatpush2.bf16.msra.mxu0 0
    %127 = vmatprep.subr.bf16.mxu0 0
    %128 = vmatpush2.bf16.msra.mxu0 0
    %129 = vmatprep.subr.bf16.mxu0 0
    %130 = vmatpush2.bf16.msra.mxu0 0
    %131 = vmatprep.subr.bf16.mxu0 0
    %132 = vmatpush2.bf16.msra.mxu0 0
    %133 = vmatprep.subr.bf16.mxu0 0
    %134 = vmatpush2.bf16.msra.mxu0 0
    %135 = vmatprep.mubr.bf16.mxu0 0
    %136 = vmatmul.mubr.bf16.gmra.mxu0 %v101
    %v137 = vpop.f32.mrf.mxu0
    %v138 = vadd.f32 %v79, %v137
    %v139 = vpop.f32.mrf.mxu0
    %v140 = vpop.f32.mrf.mxu0
    %v141 = vpop.f32.mrf.mxu0
    %142 = vdwg.mxu0
    %v143 = vmax.f32 %v138, 0.0
    %v144 = vpack.c.bf16 %v143, %v143
    %v145 = vld [vmem:[#allocation2] sm:$0xf]
    %v146 = vld [vmem:[#allocation2 + $0x4] sm:$0xf]
    %v147 = vld [vmem:[#allocation2 + $0x8] sm:$0xf]
    %v148 = vld [vmem:[#allocation2 + $0xc] sm:$0xf]
    %v149 = vld [vmem:[#allocation2 + $0x10] sm:$0xf]
    %v150 = vld [vmem:[#allocation2 + $0x14] sm:$0xf]
    %v151 = vld [vmem:[#allocation2 + $0x18] sm:$0xf]
    %v152 = vld [vmem:[#allocation2 + $0x1c] sm:$0xf]
    %v153 = vld [vmem:[#allocation2 + $0x20] sm:$0xf]
    %v154 = vld [vmem:[#allocation2 + $0x24] sm:$0xf]
    %v155 = vld [vmem:[#allocation2 + $0x28] sm:$0xf]
    %v156 = vld [vmem:[#allocation2 + $0x2c] sm:$0xf]
    %v157 = vld [vmem:[#allocation2 + $0x30] sm:$0xf]
    %v158 = vld [vmem:[#allocation2 + $0x34] sm:$0xf]
    %v159 = vld [vmem:[#allocation2 + $0x38] sm:$0xf]
    %v160 = vld [vmem:[#allocation2 + $0x3c] sm:$0xf]
    %v161 = vld [vmem:[%s4] sm:$0x1]
    %v163 = vlaneseq
    %v164 = vshrl.u32 %v163, 7
    %v165 = vsub.s32 0, %v164
    %v166 = vrot.slane %v161, %v165
    %v184 = vunpack.c.l.b16 %v145
    %v185 = vunpack.c.l.b16 %v146
    %v186 = vunpack.c.l.b16 %v147
    %v187 = vunpack.c.l.b16 %v148
    %v188 = vunpack.c.l.b16 %v149
    %v189 = vunpack.c.l.b16 %v150
    %v190 = vunpack.c.l.b16 %v151
    %v191 = vunpack.c.l.b16 %v152
    %v192 = vunpack.c.l.b16 %v153
    %v193 = vunpack.c.l.b16 %v154
    %v194 = vunpack.c.l.b16 %v155
    %v195 = vunpack.c.l.b16 %v156
    %v196 = vunpack.c.l.b16 %v157
    %v197 = vunpack.c.l.b16 %v158
    %v198 = vunpack.c.l.b16 %v159
    %v199 = vunpack.c.l.b16 %v160
    %v200 = vpack.c.b16 %v185, %v184
    %v201 = vpack.c.b16 %v187, %v186
    %v202 = vpack.c.b16 %v189, %v188
    %v203 = vpack.c.b16 %v191, %v190
    %v204 = vpack.c.b16 %v193, %v192
    %v205 = vpack.c.b16 %v195, %v194
    %v206 = vpack.c.b16 %v197, %v196
    %v207 = vpack.c.b16 %v199, %v198
    %216 = vmatprep.subr.bf16.mxu0 0
    %217 = vmatpush1.bf16.msra.mxu0 %v207
    %218 = vmatprep.subr.bf16.mxu0 0
    %219 = vmatpush1.bf16.msra.mxu0 %v206
    %220 = vmatprep.subr.bf16.mxu0 0
    %221 = vmatpush1.bf16.msra.mxu0 %v205
    %222 = vmatprep.subr.bf16.mxu0 0
    %223 = vmatpush1.bf16.msra.mxu0 %v204
    %224 = vmatprep.subr.bf16.mxu0 0
    %225 = vmatpush1.bf16.msra.mxu0 %v203
    %226 = vmatprep.subr.bf16.mxu0 0
    %227 = vmatpush1.bf16.msra.mxu0 %v202
    %228 = vmatprep.subr.bf16.mxu0 0
    %229 = vmatpush1.bf16.msra.mxu0 %v201
    %230 = vmatprep.subr.bf16.mxu0 0
    %231 = vmatpush1.bf16.msra.mxu0 %v200
    %232 = vmatprep.subr.bf16.mxu0 0
    %233 = vmatpush2.bf16.msra.mxu0 0
    %234 = vmatprep.subr.bf16.mxu0 0
    %235 = vmatpush2.bf16.msra.mxu0 0
    %236 = vmatprep.subr.bf16.mxu0 0
    %237 = vmatpush2.bf16.msra.mxu0 0
    %238 = vmatprep.subr.bf16.mxu0 0
    %239 = vmatpush2.bf16.msra.mxu0 0
    %240 = vmatprep.subr.bf16.mxu0 0
    %241 = vmatpush2.bf16.msra.mxu0 0
    %242 = vmatprep.subr.bf16.mxu0 0
    %243 = vmatpush2.bf16.msra.mxu0 0
    %244 = vmatprep.subr.bf16.mxu0 0
    %245 = vmatpush2.bf16.msra.mxu0 0
    %246 = vmatprep.subr.bf16.mxu0 0
    %247 = vmatpush2.bf16.msra.mxu0 0
    %248 = vmatprep.mubr.bf16.mxu0 0
    %249 = vmatmul.mubr.bf16.gmra.mxu0 %v144
    %v250 = vpop.f32.mrf.mxu0
    %v251 = vadd.f32 %v166, %v250
    %v252 = vpop.f32.mrf.mxu0
    %v253 = vpop.f32.mrf.mxu0
    %v254 = vpop.f32.mrf.mxu0
    %255 = vdwg.mxu0
    %v256 = vmax.f32 %v251, 0.0
    %v257 = vpack.c.bf16 %v256, %v256
    %v258 = vld [vmem:[#allocation4] sm:$0xf]
    %v259 = vld [vmem:[#allocation4 + $0x4] sm:$0xf]
    %v260 = vld [vmem:[#allocation4 + $0x8] sm:$0xf]
    %v261 = vld [vmem:[#allocation4 + $0xc] sm:$0xf]
    %v262 = vld [vmem:[#allocation4 + $0x10] sm:$0xf]
    %v263 = vld [vmem:[#allocation4 + $0x14] sm:$0xf]
    %v264 = vld [vmem:[#allocation4 + $0x18] sm:$0xf]
    %v265 = vld [vmem:[#allocation4 + $0x1c] sm:$0xf]
    %v266 = vld [vmem:[#allocation4 + $0x20] sm:$0xf]
    %v267 = vld [vmem:[#allocation4 + $0x24] sm:$0xf]
    %v268 = vld [vmem:[#allocation4 + $0x28] sm:$0xf]
    %v269 = vld [vmem:[#allocation4 + $0x2c] sm:$0xf]
    %v270 = vld [vmem:[#allocation4 + $0x30] sm:$0xf]
    %v271 = vld [vmem:[#allocation4 + $0x34] sm:$0xf]
    %v272 = vld [vmem:[#allocation4 + $0x38] sm:$0xf]
    %v273 = vld [vmem:[#allocation4 + $0x3c] sm:$0xf]
    %v274 = vld [vmem:[#allocation6] sm:$0x1]
    %v276 = vlaneseq
    %v277 = vshrl.u32 %v276, 7
    %v278 = vsub.s32 0, %v277
    %v279 = vrot.slane %v274, %v278
    %v297 = vunpack.c.l.b16 %v258
    %v298 = vunpack.c.l.b16 %v259
    %v299 = vunpack.c.l.b16 %v260
    %v300 = vunpack.c.l.b16 %v261
    %v301 = vunpack.c.l.b16 %v262
    %v302 = vunpack.c.l.b16 %v263
    %v303 = vunpack.c.l.b16 %v264
    %v304 = vunpack.c.l.b16 %v265
    %v305 = vunpack.c.l.b16 %v266
    %v306 = vunpack.c.l.b16 %v267
    %v307 = vunpack.c.l.b16 %v268
    %v308 = vunpack.c.l.b16 %v269
    %v309 = vunpack.c.l.b16 %v270
    %v310 = vunpack.c.l.b16 %v271
    %v311 = vunpack.c.l.b16 %v272
    %v312 = vunpack.c.l.b16 %v273
    %v313 = vpack.c.b16 %v298, %v297
    %v314 = vpack.c.b16 %v300, %v299
    %v315 = vpack.c.b16 %v302, %v301
    %v316 = vpack.c.b16 %v304, %v303
    %v317 = vpack.c.b16 %v306, %v305
    %v318 = vpack.c.b16 %v308, %v307
    %v319 = vpack.c.b16 %v310, %v309
    %v320 = vpack.c.b16 %v312, %v311
    %329 = vmatprep.subr.bf16.mxu0 0
    %330 = vmatpush1.bf16.msra.mxu0 %v320
    %331 = vmatprep.subr.bf16.mxu0 0
    %332 = vmatpush1.bf16.msra.mxu0 %v319
    %333 = vmatprep.subr.bf16.mxu0 0
    %334 = vmatpush1.bf16.msra.mxu0 %v318
    %335 = vmatprep.subr.bf16.mxu0 0
    %336 = vmatpush1.bf16.msra.mxu0 %v317
    %337 = vmatprep.subr.bf16.mxu0 0
    %338 = vmatpush1.bf16.msra.mxu0 %v316
    %339 = vmatprep.subr.bf16.mxu0 0
    %340 = vmatpush1.bf16.msra.mxu0 %v315
    %341 = vmatprep.subr.bf16.mxu0 0
    %342 = vmatpush1.bf16.msra.mxu0 %v314
    %343 = vmatprep.subr.bf16.mxu0 0
    %344 = vmatpush1.bf16.msra.mxu0 %v313
    %345 = vmatprep.subr.bf16.mxu0 0
    %346 = vmatpush2.bf16.msra.mxu0 0
    %347 = vmatprep.subr.bf16.mxu0 0
    %348 = vmatpush2.bf16.msra.mxu0 0
    %349 = vmatprep.subr.bf16.mxu0 0
    %350 = vmatpush2.bf16.msra.mxu0 0
    %351 = vmatprep.subr.bf16.mxu0 0
    %352 = vmatpush2.bf16.msra.mxu0 0
    %353 = vmatprep.subr.bf16.mxu0 0
    %354 = vmatpush2.bf16.msra.mxu0 0
    %355 = vmatprep.subr.bf16.mxu0 0
    %356 = vmatpush2.bf16.msra.mxu0 0
    %357 = vmatprep.subr.bf16.mxu0 0
    %358 = vmatpush2.bf16.msra.mxu0 0
    %359 = vmatprep.subr.bf16.mxu0 0
    %360 = vmatpush2.bf16.msra.mxu0 0
    %361 = vmatprep.mubr.bf16.mxu0 0
    %362 = vmatmul.mubr.bf16.gmra.mxu0 %v257
    %v363 = vpop.f32.mrf.mxu0
    %v364 = vadd.f32 %v279, %v363
    %v365 = vpop.f32.mrf.mxu0
    %v366 = vpop.f32.mrf.mxu0
    %v367 = vpop.f32.mrf.mxu0
    %368 = vdwg.mxu0
    %369 = vst [vmem:[%s7] sm:$0xff] %v364
    // Predicated region
    $region42: #{encoder_forward.1} parent=1 // pred_check
      _
    $region43: #{encoder_forward.1} parent=1 // pred_check_branch
      %371 = sbr.rel (0) target = $region45
    $region44: #{encoder_forward.1} parent=1 // pred_region
      _
    $region45: #{encoder_forward.1} parent=1 // pred_fallthru
      _
    // Predicated region
    $region46: #{encoder_forward.1} parent=1 // pred_check
      _
    $region47: #{encoder_forward.1} parent=1 // pred_check_branch
      %373 = sbr.rel (0) target = $region49
    $region48: #{encoder_forward.1} parent=1 // pred_region
      _
    $region49: #{encoder_forward.1} parent=1 // pred_fallthru
      _
    %374 = vsyncpa [#allocation3], 1
    %375 = vsyncpa [#allocation5], 1

</llo_original>
